<compile_context>
chip_gen: v5e
topology: v5e:2x2
jax: 0.10.0
libtpu: 0.0.40
codegen_flags: <defaults>
</compile_context>

<pallas_src>
import functools

import jax
import jax.numpy as jnp
from jax.experimental import pallas as pl
from jax.experimental.pallas import tpu as pltpu


_ROWS_PER_STEP = 32          # rows gathered per grid step on the HBM path (mult. of 8)
_MAX_FAST_BLOCK_ROWS = 128   # ids per grid step on the VMEM-resident fast path


# --------------------------------------------------------------------------
# Kernels
# --------------------------------------------------------------------------
def _dma_gather_kernel(rows_per_step, ids_ref, table_hbm, out_ref, buf, sems):
    """Gather `rows_per_step` table rows per grid step, double-buffered.

    ids_ref  : SMEM scalar-prefetch, (n_pad,) int32 row indices.
    table_hbm: full (V, D) table left in HBM (memory_space=pl.ANY).
    out_ref  : (rows_per_step, D) dense, lane-aligned output block.
    buf      : VMEM scratch (2*rows_per_step, D) -- two row-block slots.
    sems     : DMA semaphores, one per scratch row.
    """
    i = pl.program_id(0)
    n = pl.num_programs(0)
    r_per = rows_per_step
    slot = i & 1

    def issue_block(block_idx, slot_idx):
        dst_base = slot_idx * r_per
        src_base = block_idx * r_per
        for r in range(r_per):            # static unroll: r_per concurrent DMAs
            row = ids_ref[src_base + r]
            pltpu.make_async_copy(
                table_hbm.at[pl.ds(row, 1)],
                buf.at[pl.ds(dst_base + r, 1)],
                sems.at[dst_base + r],
            ).start()

    # Prime the pipeline on the first step.
    @pl.when(i == 0)
    def _():
        issue_block(0, 0)

    # Prefetch the next row block into the other slot while this one completes.
    @pl.when(i + 1 < n)
    def _():
        issue_block(i + 1, 1 - slot)

    # Wait for this step's rows.  Only the shape / semaphore matter for wait,
    # so the src slice can be any (1, D) view of the table.
    dst_base = slot * r_per
    for r in range(r_per):
        pltpu.make_async_copy(
            table_hbm.at[pl.ds(0, 1)],
            buf.at[pl.ds(dst_base + r, 1)],
            sems.at[dst_base + r],
        ).wait()

    start = pl.multiple_of(slot * r_per, r_per)
    out_ref[...] = buf[pl.ds(start, r_per), :]


def _onehot_gather_kernel(table_ref, ids_ref, out_ref):
    """Small-table fast path: whole table VMEM-resident, gather = one-hot @ table."""
    ids = ids_ref[...]                                   # (R, 1) int32
    rows = ids.shape[0]
    vocab = table_ref.shape[0]
    onehot = (ids == jax.lax.broadcasted_iota(jnp.int32, (rows, vocab), 1))
    onehot = onehot.astype(table_ref.dtype)
    acc = jnp.dot(onehot, table_ref[...], preferred_element_type=jnp.float32)
    out_ref[...] = acc.astype(out_ref.dtype)


# --------------------------------------------------------------------------
# Wrappers
# --------------------------------------------------------------------------
def _fast_path_table_bytes():
    """Tables at or below this size stay fully VMEM-resident (generation aware)."""
    try:
        vmem_bytes = pltpu.get_tpu_info().vmem_capacity_bytes
    except Exception:                       # info query unavailable -> be conservative
        vmem_bytes = 64 << 20
    # Keep the double-buffered table + one-hot intermediate well inside the
    # default scoped-VMEM budget on every generation (v7x has only 64 MiB).
    return min(1 << 20, vmem_bytes // 32)


def _pad_ids(flat_ids, vocab, multiple):
    """Clamp ids into range and pad to a multiple of the per-step row count."""
    n = flat_ids.shape[0]
    n_pad = multiple * pl.cdiv(n, multiple)
    ids = jnp.clip(flat_ids.astype(jnp.int32), 0, vocab - 1)
    if n_pad != n:
        ids = jnp.pad(ids, (0, n_pad - n))   # padded rows read row 0 (harmless)
    return ids, n, n_pad


def _lookup_flat_gather(table, flat_ids, rows_per_step=_ROWS_PER_STEP):
    """Large-vocab path: manual double-buffered HBM row gather."""
    vocab, dim = table.shape
    ids, n, n_pad = _pad_ids(flat_ids, vocab, rows_per_step)
    out = pl.pallas_call(
        functools.partial(_dma_gather_kernel, rows_per_step),
        out_shape=jax.ShapeDtypeStruct((n_pad, dim), table.dtype),
        grid_spec=pltpu.PrefetchScalarGridSpec(
            num_scalar_prefetch=1,                       # ids -> SMEM
            grid=(n_pad // rows_per_step,),
            in_specs=[pl.BlockSpec(memory_space=pl.ANY)],  # table stays in HBM
            out_specs=pl.BlockSpec((rows_per_step, dim),
                                   lambda i, ids_sref: (i, 0)),
            scratch_shapes=[
                pltpu.VMEM((2 * rows_per_step, dim), table.dtype),
                pltpu.SemaphoreType.DMA((2 * rows_per_step,)),
            ],
        ),
        # Cross-step prefetch keeps state in scratch -> keep this axis serial.
        compiler_params=pltpu.CompilerParams(
            dimension_semantics=("arbitrary",)),
    )(ids, table)
    return out[:n] if n_pad != n else out


def _lookup_flat_vmem(table, flat_ids, max_block_rows=_MAX_FAST_BLOCK_ROWS):
    """Small-table fast path: table resident in VMEM, one-hot matmul on the MXU."""
    vocab, dim = table.shape
    n = flat_ids.shape[0]
    block_rows = min(max_block_rows, 8 * pl.cdiv(n, 8))   # sublane aligned
    ids, n, n_pad = _pad_ids(flat_ids, vocab, block_rows)
    ids2d = ids.reshape(n_pad, 1)
    out = pl.pallas_call(
        _onehot_gather_kernel,
        out_shape=jax.ShapeDtypeStruct((n_pad, dim), table.dtype),
        grid_spec=pltpu.PrefetchScalarGridSpec(
            num_scalar_prefetch=0,
            grid=(n_pad // block_rows,),
            in_specs=[
                pl.BlockSpec((vocab, dim), lambda i: (0, 0)),   # whole table
                pl.BlockSpec((block_rows, 1), lambda i: (i, 0)),
            ],
            out_specs=pl.BlockSpec((block_rows, dim), lambda i: (i, 0)),
        ),
        # Each step writes a distinct block, no carried state -> shard on v7x.
        compiler_params=pltpu.CompilerParams(
            dimension_semantics=("parallel",)),
    )(table, ids2d)
    return out[:n] if n_pad != n else out


def _lookup_flat(table, flat_ids):
    vocab, dim = table.shape
    table_bytes = vocab * dim * jnp.dtype(table.dtype).itemsize
    if table_bytes <= _fast_path_table_bytes():
        return _lookup_flat_vmem(table, flat_ids)
    return _lookup_flat_gather(table, flat_ids)


def embedding_lookup(table, ids):
    """Embedding lookup for arbitrarily-shaped integer `ids` -> ids.shape + (D,)."""
    ids = jnp.asarray(ids)
    rows = _lookup_flat(table, ids.reshape(-1))
    return rows.reshape(ids.shape + (table.shape[1],))


def _lookup_many(table, id_arrays):
    """Fuse several lookups into the same table into ONE kernel launch."""
    id_arrays = [jnp.asarray(a) for a in id_arrays]
    flats = [a.reshape(-1) for a in id_arrays]
    sizes = [f.shape[0] for f in flats]
    flat_all = flats[0] if len(flats) == 1 else jnp.concatenate(flats)
    rows = _lookup_flat(table, flat_all)
    dim = table.shape[1]
    outs, off = [], 0
    for a, sz in zip(id_arrays, sizes):
        outs.append(rows[off:off + sz].reshape(a.shape + (dim,)))
        off += sz
    return outs


# --------------------------------------------------------------------------
# Module
# --------------------------------------------------------------------------
@functools.partial(jax.jit, static_argnames=("neg_sample",))
def _din_input_embedding_forward(user_table, material_table, category_table,
                                 user, material, category,
                                 material_historical, category_historical,
                                 material_historical_neg,
                                 category_historical_neg,
                                 *, neg_sample=False):
    (user_emb,) = _lookup_many(user_table, [user])
    if neg_sample:
        material_emb, material_hist_emb, material_hist_neg_emb = _lookup_many(
            material_table,
            [material, material_historical, material_historical_neg])
        category_emb, category_hist_emb, category_hist_neg_emb = _lookup_many(
            category_table,
            [category, category_historical, category_historical_neg])
    else:
        material_emb, material_hist_emb = _lookup_many(
            material_table, [material, material_historical])
        category_emb, category_hist_emb = _lookup_many(
            category_table, [category, category_historical])
        material_hist_neg_emb = None
        category_hist_neg_emb = None
    ans = [user_emb, material_hist_emb, category_hist_emb,
           material_emb, category_emb,
           material_hist_neg_emb, category_hist_neg_emb]
    # torch's .squeeze() removes ALL size-1 dims (kept for spec fidelity, even
    # though a B==1 or T==1 axis silently disappears).
    return tuple(jnp.squeeze(x) if x is not None else None for x in ans)


class InputEmbedding:
    """JAX/Pallas port of models/DIN.py::InputEmbedding."""

    def __init__(self, n_uid, n_mid, n_cid, embedding_dim, key,
                 dtype=jnp.float32):
        # nn.Embedding default init is N(0, 1). `dtype=jnp.bfloat16` halves the
        # HBM bytes per gathered row (the kernel is purely bandwidth bound).
        ku, km, kc = jax.random.split(key, 3)
        self.user_embedding = jax.random.normal(
            ku, (n_uid, embedding_dim), dtype=jnp.float32).astype(dtype)
        self.material_embedding = jax.random.normal(
            km, (n_mid, embedding_dim), dtype=jnp.float32).astype(dtype)
        self.category_embedding = jax.random.normal(
            kc, (n_cid, embedding_dim), dtype=jnp.float32).astype(dtype)

    def __call__(self, user, material, category,
                 material_historical, category_historical,
                 material_historical_neg, category_historical_neg,
                 neg_sample=False):
        return _din_input_embedding_forward(
            self.user_embedding, self.material_embedding,
            self.category_embedding,
            user, material, category,
            material_historical, category_historical,
            material_historical_neg, category_historical_neg,
            neg_sample=neg_sample)


# --------------------------------------------------------------------------
# Demo / correctness check
# --------------------------------------------------------------------------
if __name__ == "__main__":
    key = jax.random.PRNGKey(0)
    (k_params, k_u, k_m, k_c, k_mh, k_ch, k_mhn, k_chn,
     k_big_tab, k_big_ids) = jax.random.split(key, 10)

    B, T, D = 2, 8, 128
    n_uid, n_mid, n_cid = 32, 64, 16

    model = InputEmbedding(n_uid, n_mid, n_cid, D, k_params)

    user = jax.random.randint(k_u, (B,), 0, n_uid, dtype=jnp.int32)
    material = jax.random.randint(k_m, (B,), 0, n_mid, dtype=jnp.int32)
    category = jax.random.randint(k_c, (B,), 0, n_cid, dtype=jnp.int32)
    material_historical = jax.random.randint(k_mh, (B, T), 0, n_mid,
                                             dtype=jnp.int32)
    category_historical = jax.random.randint(k_ch, (B, T), 0, n_cid,
                                             dtype=jnp.int32)
    material_historical_neg = jax.random.randint(k_mhn, (B, T), 0, n_mid,
                                                 dtype=jnp.int32)
    category_historical_neg = jax.random.randint(k_chn, (B, T), 0, n_cid,
                                                 dtype=jnp.int32)

    def ref_lookup(table, ids):
        return jnp.squeeze(table[ids])

    # ---- forward pass (tiny tables -> VMEM-resident one-hot/MXU fast path) --
    outs = model(user, material, category,
                 material_historical, category_historical,
                 material_historical_neg, category_historical_neg,
                 neg_sample=False)
    jax.block_until_ready([o for o in outs if o is not None])

    assert jnp.allclose(outs[0], ref_lookup(model.user_embedding, user))
    assert jnp.allclose(outs[1], ref_lookup(model.material_embedding,
                                            material_historical))
    assert jnp.allclose(outs[2], ref_lookup(model.category_embedding,
                                            category_historical))
    assert jnp.allclose(outs[3], ref_lookup(model.material_embedding, material))
    assert jnp.allclose(outs[4], ref_lookup(model.category_embedding, category))
    assert outs[5] is None and outs[6] is None

    # ---- neg_sample=True path (3-way fused lookups per table) ---------------
    outs_neg = model(user, material, category,
                     material_historical, category_historical,
                     material_historical_neg, category_historical_neg,
                     neg_sample=True)
    jax.block_until_ready([o for o in outs_neg if o is not None])
    assert jnp.allclose(outs_neg[5], ref_lookup(model.material_embedding,
                                                material_historical_neg))
    assert jnp.allclose(outs_neg[6], ref_lookup(model.category_embedding,
                                                category_historical_neg))

    # ---- large-vocab path: row-batched, double-buffered HBM DMA gather ------
    big_vocab = 4096                         # 2 MiB table -> HBM gather path
    big_table = jax.random.normal(k_big_tab, (big_vocab, D), dtype=jnp.float32)
    big_ids = jax.random.randint(k_big_ids, (5, 13), 0, big_vocab,
                                 dtype=jnp.int32)      # ragged vs. R=32: pads
    big_out = embedding_lookup(big_table, big_ids)
    jax.block_until_ready(big_out)
    assert jnp.allclose(big_out, big_table[big_ids])

    print("KERNEL_OK")
</pallas_src>

<mosaic_0001>
module attributes {stable_mosaic.version = 11 : i64} {
  func.func @_onehot_gather_kernel(%arg0: i32, %arg1: memref<32x128xf32, #tpu.memory_space<vmem>>, %arg2: memref<8x1xi32, #tpu.memory_space<vmem>>, %arg3: memref<8x128xf32, #tpu.memory_space<vmem>>) attributes {dimension_semantics = [#tpu.dimension_semantics<parallel>], iteration_bounds = array<i64: 1>, scalar_prefetch = 0 : i64, scratch_operands = 0 : i64, tpu.core_type = #tpu.core_type<tc>, window_params = [{pipeline_mode = #tpu.pipeline_mode<synchronous>, transform_indices = @transform_0, window_bounds = array<i64: 32, 128>}, {transform_indices = @transform_1, window_bounds = array<i64: 8, 1>}, {transform_indices = @transform_2, window_bounds = array<i64: 8, 128>}]} {
    %c0 = arith.constant 0 : index
    %c0_0 = arith.constant 0 : index
    %0 = vector.load %arg2[%c0, %c0_0] : memref<8x1xi32, #tpu.memory_space<vmem>>, vector<8x1xi32>
    %1 = tpu.iota {dimensions = array<i32: 1>} : vector<8x32xi32>
    %2 = vector.broadcast %0 : vector<8x1xi32> to vector<8x32xi32>
    %3 = arith.cmpi eq, %2, %1 : vector<8x32xi32>
    %4 = arith.extui %3 : vector<8x32xi1> to vector<8x32xi32>
    %5 = arith.sitofp %4 : vector<8x32xi32> to vector<8x32xf32>
    %c0_1 = arith.constant 0 : index
    %c0_2 = arith.constant 0 : index
    %6 = vector.load %arg1[%c0_1, %c0_2] : memref<32x128xf32, #tpu.memory_space<vmem>>, vector<32x128xf32>
    %cst = arith.constant dense<0.000000e+00> : vector<8x128xf32>
    %7 = tpu.matmul %5, %6, %cst {dimension_numbers = #tpu.dot_dimension_numbers<[1], [0], [0], [1], [0, 0, 1, 1], [], []>} : vector<8x32xf32>, vector<32x128xf32>, vector<8x128xf32> -> vector<8x128xf32>
    %c0_3 = arith.constant 0 : index
    %c0_4 = arith.constant 0 : index
    %8 = vector.load %arg3[%c0_3, %c0_4] : memref<8x128xf32, #tpu.memory_space<vmem>>, vector<8x128xf32>
    tpu.vector_store %arg3[%c0_3, %c0_4], %7 {strides = array<i32>} : memref<8x128xf32, #tpu.memory_space<vmem>>, vector<8x128xf32>,
    return
  }
  func.func @transform_0(%arg0: i32) -> (i32, i32) {
    %c0_i32 = arith.constant 0 : i32
    %c0_i32_0 = arith.constant 0 : i32
    %c0_i32_1 = arith.constant 0 : i32
    return %c0_i32, %c0_i32_0 : i32, i32
  }
  func.func @transform_1(%arg0: i32) -> (i32, i32) {
    %c0_i32 = arith.constant 0 : i32
    %c0_i32_0 = arith.constant 0 : i32
    return %arg0, %c0_i32 : i32, i32
  }
  func.func @transform_2(%arg0: i32) -> (i32, i32) {
    %c0_i32 = arith.constant 0 : i32
    %c0_i32_0 = arith.constant 0 : i32
    return %arg0, %c0_i32 : i32, i32
  }
}

module attributes {stable_mosaic.version = 11 : i64} {
  func.func @_onehot_gather_kernel(%arg0: i32, %arg1: memref<16x128xf32, #tpu.memory_space<vmem>>, %arg2: memref<24x1xi32, #tpu.memory_space<vmem>>, %arg3: memref<24x128xf32, #tpu.memory_space<vmem>>) attributes {dimension_semantics = [#tpu.dimension_semantics<parallel>], iteration_bounds = array<i64: 1>, scalar_prefetch = 0 : i64, scratch_operands = 0 : i64, tpu.core_type = #tpu.core_type<tc>, window_params = [{pipeline_mode = #tpu.pipeline_mode<synchronous>, transform_indices = @transform_0, window_bounds = array<i64: 16, 128>}, {transform_indices = @transform_1, window_bounds = array<i64: 24, 1>}, {transform_indices = @transform_2, window_bounds = array<i64: 24, 128>}]} {
    %c0 = arith.constant 0 : index
    %c0_0 = arith.constant 0 : index
    %0 = vector.load %arg2[%c0, %c0_0] : memref<24x1xi32, #tpu.memory_space<vmem>>, vector<24x1xi32>
    %1 = tpu.iota {dimensions = array<i32: 1>} : vector<24x16xi32>
    %2 = vector.broadcast %0 : vector<24x1xi32> to vector<24x16xi32>
    %3 = arith.cmpi eq, %2, %1 : vector<24x16xi32>
    %4 = arith.extui %3 : vector<24x16xi1> to vector<24x16xi32>
    %5 = arith.sitofp %4 : vector<24x16xi32> to vector<24x16xf32>
    %c0_1 = arith.constant 0 : index
    %c0_2 = arith.constant 0 : index
    %6 = vector.load %arg1[%c0_1, %c0_2] : memref<16x128xf32, #tpu.memory_space<vmem>>, vector<16x128xf32>
    %cst = arith.constant dense<0.000000e+00> : vector<24x128xf32>
    %7 = tpu.matmul %5, %6, %cst {dimension_numbers = #tpu.dot_dimension_numbers<[1], [0], [0], [1], [0, 0, 1, 1], [], []>} : vector<24x16xf32>, vector<16x128xf32>, vector<24x128xf32> -> vector<24x128xf32>
    %c0_3 = arith.constant 0 : index
    %c0_4 = arith.constant 0 : index
    %8 = vector.load %arg3[%c0_3, %c0_4] : memref<24x128xf32, #tpu.memory_space<vmem>>, vector<24x128xf32>
    tpu.vector_store %arg3[%c0_3, %c0_4], %7 {strides = array<i32>} : memref<24x128xf32, #tpu.memory_space<vmem>>, vector<24x128xf32>,
    return
  }
  func.func @transform_0(%arg0: i32) -> (i32, i32) {
    %c0_i32 = arith.constant 0 : i32
    %c0_i32_0 = arith.constant 0 : i32
    %c0_i32_1 = arith.constant 0 : i32
    return %c0_i32, %c0_i32_0 : i32, i32
  }
  func.func @transform_1(%arg0: i32) -> (i32, i32) {
    %c0_i32 = arith.constant 0 : i32
    %c0_i32_0 = arith.constant 0 : i32
    return %arg0, %c0_i32 : i32, i32
  }
  func.func @transform_2(%arg0: i32) -> (i32, i32) {
    %c0_i32 = arith.constant 0 : i32
    %c0_i32_0 = arith.constant 0 : i32
    return %arg0, %c0_i32 : i32, i32
  }
}

module attributes {stable_mosaic.version = 11 : i64} {
  func.func @_onehot_gather_kernel(%arg0: i32, %arg1: memref<64x128xf32, #tpu.memory_space<vmem>>, %arg2: memref<24x1xi32, #tpu.memory_space<vmem>>, %arg3: memref<24x128xf32, #tpu.memory_space<vmem>>) attributes {dimension_semantics = [#tpu.dimension_semantics<parallel>], iteration_bounds = array<i64: 1>, scalar_prefetch = 0 : i64, scratch_operands = 0 : i64, tpu.core_type = #tpu.core_type<tc>, window_params = [{pipeline_mode = #tpu.pipeline_mode<synchronous>, transform_indices = @transform_0, window_bounds = array<i64: 64, 128>}, {transform_indices = @transform_1, window_bounds = array<i64: 24, 1>}, {transform_indices = @transform_2, window_bounds = array<i64: 24, 128>}]} {
    %c0 = arith.constant 0 : index
    %c0_0 = arith.constant 0 : index
    %0 = vector.load %arg2[%c0, %c0_0] : memref<24x1xi32, #tpu.memory_space<vmem>>, vector<24x1xi32>
    %1 = tpu.iota {dimensions = array<i32: 1>} : vector<24x64xi32>
    %2 = vector.broadcast %0 : vector<24x1xi32> to vector<24x64xi32>
    %3 = arith.cmpi eq, %2, %1 : vector<24x64xi32>
    %4 = arith.extui %3 : vector<24x64xi1> to vector<24x64xi32>
    %5 = arith.sitofp %4 : vector<24x64xi32> to vector<24x64xf32>
    %c0_1 = arith.constant 0 : index
    %c0_2 = arith.constant 0 : index
    %6 = vector.load %arg1[%c0_1, %c0_2] : memref<64x128xf32, #tpu.memory_space<vmem>>, vector<64x128xf32>
    %cst = arith.constant dense<0.000000e+00> : vector<24x128xf32>
    %7 = tpu.matmul %5, %6, %cst {dimension_numbers = #tpu.dot_dimension_numbers<[1], [0], [0], [1], [0, 0, 1, 1], [], []>} : vector<24x64xf32>, vector<64x128xf32>, vector<24x128xf32> -> vector<24x128xf32>
    %c0_3 = arith.constant 0 : index
    %c0_4 = arith.constant 0 : index
    %8 = vector.load %arg3[%c0_3, %c0_4] : memref<24x128xf32, #tpu.memory_space<vmem>>, vector<24x128xf32>
    tpu.vector_store %arg3[%c0_3, %c0_4], %7 {strides = array<i32>} : memref<24x128xf32, #tpu.memory_space<vmem>>, vector<24x128xf32>,
    return
  }
  func.func @transform_0(%arg0: i32) -> (i32, i32) {
    %c0_i32 = arith.constant 0 : i32
    %c0_i32_0 = arith.constant 0 : i32
    %c0_i32_1 = arith.constant 0 : i32
    return %c0_i32, %c0_i32_0 : i32, i32
  }
  func.func @transform_1(%arg0: i32) -> (i32, i32) {
    %c0_i32 = arith.constant 0 : i32
    %c0_i32_0 = arith.constant 0 : i32
    return %arg0, %c0_i32 : i32, i32
  }
  func.func @transform_2(%arg0: i32) -> (i32, i32) {
    %c0_i32 = arith.constant 0 : i32
    %c0_i32_0 = arith.constant 0 : i32
    return %arg0, %c0_i32 : i32, i32
  }
}

</mosaic_0001>

<llo_original>
// kernel: _din_input_embedding_forward.3
$region0: #{_din_input_embedding_forward.3}
  #allocation0 [shape = 'u32[]', space=smem, size = 0x4, offset = 0x4, fixed_abs, tag = 'smem constant byte address 0x4 - core index']
  #allocation1 [shape = 'u32[72,128]{1,0:T(1,128)}', space=vmem, size = 0x9000, scoped, tag = 'internal scratch']
  %s0 = inlined_call_operand.hbm [shape: f32[32,128], index: 0, kind: input, shape index: {}]
  %s1 = inlined_call_operand.vmem [shape: s32[8,1], index: 1, kind: input, shape index: {}]
  %s2 = inlined_call_operand.vmem [shape: f32[8,128], index: 2, kind: output, shape index: {}]
  %s3 = sld [smem:[#allocation0]]
  $region22: #{_din_input_embedding_forward.3} parent=0
    _
  %s5 = ssub.s32 1, %s3
  %s6 = scalar_select 0, %s5, %s3
  $region1: #{_din_input_embedding_forward.3} parent=0
    #allocation2 [shape = 'u8[16384]{0}', space=vmem, size = 0x4000, scoped, tag = 'input window, operand 0, single buffered']
    #allocation3 [shape = 's32[1]{0}', space=sflag, size = 0x4, scoped, tag = 'scoped memory for _din_input_embedding_forward.3']
    %7 = vsyncpa [#allocation3], 0
    // Predicated region
    $region2: #{_din_input_embedding_forward.3} parent=1 // pred_check
      _
    $region3: #{_din_input_embedding_forward.3} parent=1 // pred_check_branch
      %9 = sbr.rel (0) target = $region5
    $region4: #{_din_input_embedding_forward.3} parent=1 // pred_region
      %11 = vsyncadd [#allocation3], 0
      %s12 = sshll.u32 %s0, 4
      %s13 = int_to_ptr.hbm [resolvable:$true] %s12
      %s14 = sshll.u32 [#allocation2], 4
      %s15 = int_to_ptr.vmem [resolvable:$true] %s14
      %20 = dma.hbm_to_vmem [thread:$0]  %s13, 512, %s15, [#allocation3], 128, 128, 8
    $region5: #{_din_input_embedding_forward.3} parent=1 // pred_fallthru
      _
    // Predicated region
    $region6: #{_din_input_embedding_forward.3} parent=1 // pred_check
      _
    $region7: #{_din_input_embedding_forward.3} parent=1 // pred_check_branch
      %22 = sbr.rel (0) target = $region9
    $region8: #{_din_input_embedding_forward.3} parent=1 // pred_region
      _
    $region9: #{_din_input_embedding_forward.3} parent=1 // pred_fallthru
      _
    // Predicated region
    $region10: #{_din_input_embedding_forward.3} parent=1 // pred_check
      _
    $region11: #{_din_input_embedding_forward.3} parent=1 // pred_check_branch
      %24 = sbr.rel (0) target = $region13
    $region12: #{_din_input_embedding_forward.3} parent=1 // pred_region
      %26 = dma.done [#allocation3], 512
    $region13: #{_din_input_embedding_forward.3} parent=1 // pred_fallthru
      _
    %v27 = vld [vmem:[%s1] sm:$0xff]
    %v28 = vlaneseq
    %v29 = vand.u32 %v28, 127
    %30 = vset.pattern.permute.xlu0 0
    %31 = vperm.xlu0 %30, %v27
    %v32 = vpop.permute.xlu0 %31
    %vm33 = vcmp.eq.s32.totalorder %v32, %v29
    %v34 = vsel %vm33, 1, 0
    %v35 = vcvt.s32.f32 %v34
    %v36 = vld [vmem:[#allocation2] sm:$0xff]
    %v37 = vld [vmem:[#allocation2 + $0x8] sm:$0xff]
    %v38 = vld [vmem:[#allocation2 + $0x10] sm:$0xff]
    %v39 = vld [vmem:[#allocation2 + $0x18] sm:$0xff]
    %vm40 = vcmask 261120
    %v42 = vsel %vm40, %v35, 0
    %44 = vmatpush.msra.mxu0 0.0
    %45 = vmatpush.msra.mxu0 0.0
    %46 = vmatpush.msra.mxu0 0.0
    %47 = vmatpush.msra.mxu0 0.0
    %48 = vmatpush.msra.mxu0 0.0
    %49 = vmatpush.msra.mxu0 0.0
    %50 = vmatpush.msra.mxu0 0.0
    %51 = vmatpush.msra.mxu0 0.0
    %52 = vmatpush.msra.mxu0 0.0
    %53 = vmatpush.msra.mxu0 0.0
    %54 = vmatpush.msra.mxu0 0.0
    %55 = vmatpush.msra.mxu0 0.0
    %56 = vmatpush.msra.mxu0 %v39
    %57 = vmatpush.msra.mxu0 %v38
    %58 = vmatpush.msra.mxu0 %v37
    %59 = vmatpush.msra.mxu0 %v36
    %60 = vmatmul.f32.gmra.mxu0 %v42
    %v61 = vpop.f32.mrf.mxu0
    %v62 = vadd.f32 0.0, %v61
    %63 = vdwg.mxu0
    %64 = vst [vmem:[%s2] sm:$0xff] %v62
    // Predicated region
    $region14: #{_din_input_embedding_forward.3} parent=1 // pred_check
      _
    $region15: #{_din_input_embedding_forward.3} parent=1 // pred_check_branch
      %66 = sbr.rel (0) target = $region17
    $region16: #{_din_input_embedding_forward.3} parent=1 // pred_region
      _
    $region17: #{_din_input_embedding_forward.3} parent=1 // pred_fallthru
      _
    // Predicated region
    $region18: #{_din_input_embedding_forward.3} parent=1 // pred_check
      _
    $region19: #{_din_input_embedding_forward.3} parent=1 // pred_check_branch
      %68 = sbr.rel (0) target = $region21
    $region20: #{_din_input_embedding_forward.3} parent=1 // pred_region
      _
    $region21: #{_din_input_embedding_forward.3} parent=1 // pred_fallthru
      _
    %69 = vsyncpa [#allocation3], 1

// kernel: _din_input_embedding_forward.5
$region0: #{_din_input_embedding_forward.5}
  #allocation0 [shape = 'u32[]', space=smem, size = 0x4, offset = 0x4, fixed_abs, tag = 'smem constant byte address 0x4 - core index']
  #allocation1 [shape = 'u32[72,128]{1,0:T(1,128)}', space=vmem, size = 0x9000, scoped, tag = 'internal scratch']
  %s0 = inlined_call_operand.hbm [shape: f32[16,128], index: 0, kind: input, shape index: {}]
  %s1 = inlined_call_operand.vmem [shape: s32[24,1], index: 1, kind: input, shape index: {}]
  %s2 = inlined_call_operand.vmem [shape: f32[24,128], index: 2, kind: output, shape index: {}]
  %s3 = sld [smem:[#allocation0]]
  $region22: #{_din_input_embedding_forward.5} parent=0
    _
  %s5 = ssub.s32 1, %s3
  %s6 = scalar_select 0, %s5, %s3
  $region1: #{_din_input_embedding_forward.5} parent=0
    #allocation2 [shape = 'u8[8192]{0}', space=vmem, size = 0x2000, scoped, tag = 'input window, operand 0, single buffered']
    #allocation3 [shape = 's32[1]{0}', space=sflag, size = 0x4, scoped, tag = 'scoped memory for _din_input_embedding_forward.5']
    %7 = vsyncpa [#allocation3], 0
    // Predicated region
    $region2: #{_din_input_embedding_forward.5} parent=1 // pred_check
      _
    $region3: #{_din_input_embedding_forward.5} parent=1 // pred_check_branch
      %9 = sbr.rel (0) target = $region5
    $region4: #{_din_input_embedding_forward.5} parent=1 // pred_region
      %11 = vsyncadd [#allocation3], 0
      %s12 = sshll.u32 %s0, 4
      %s13 = int_to_ptr.hbm [resolvable:$true] %s12
      %s14 = sshll.u32 [#allocation2], 4
      %s15 = int_to_ptr.vmem [resolvable:$true] %s14
      %20 = dma.hbm_to_vmem [thread:$0]  %s13, 256, %s15, [#allocation3], 128, 128, 8
    $region5: #{_din_input_embedding_forward.5} parent=1 // pred_fallthru
      _
    // Predicated region
    $region6: #{_din_input_embedding_forward.5} parent=1 // pred_check
      _
    $region7: #{_din_input_embedding_forward.5} parent=1 // pred_check_branch
      %22 = sbr.rel (0) target = $region9
    $region8: #{_din_input_embedding_forward.5} parent=1 // pred_region
      _
    $region9: #{_din_input_embedding_forward.5} parent=1 // pred_fallthru
      _
    // Predicated region
    $region10: #{_din_input_embedding_forward.5} parent=1 // pred_check
      _
    $region11: #{_din_input_embedding_forward.5} parent=1 // pred_check_branch
      %24 = sbr.rel (0) target = $region13
    $region12: #{_din_input_embedding_forward.5} parent=1 // pred_region
      %26 = dma.done [#allocation3], 256
    $region13: #{_din_input_embedding_forward.5} parent=1 // pred_fallthru
      _
    %v27 = vld [vmem:[%s1] sm:$0xff]
    %v28 = vld [vmem:[%s1 + $0x8] sm:$0xff]
    %v29 = vld [vmem:[%s1 + $0x10] sm:$0xff]
    %v30 = vlaneseq
    %v31 = vand.u32 %v30, 127
    %32 = vset.pattern.permute.xlu0 0
    %33 = vperm.xlu0 %32, %v27
    %v34 = vpop.permute.xlu0 %33
    %35 = vset.pattern.permute.xlu0 0
    %36 = vperm.xlu0 %35, %v28
    %v37 = vpop.permute.xlu0 %36
    %38 = vset.pattern.permute.xlu0 0
    %39 = vperm.xlu0 %38, %v29
    %v40 = vpop.permute.xlu0 %39
    %vm41 = vcmp.eq.s32.totalorder %v34, %v31
    %vm42 = vcmp.eq.s32.totalorder %v37, %v31
    %vm43 = vcmp.eq.s32.totalorder %v40, %v31
    %v44 = vsel %vm41, 1, 0
    %v45 = vsel %vm42, 1, 0
    %v46 = vsel %vm43, 1, 0
    %v47 = vcvt.s32.f32 %v44
    %v48 = vcvt.s32.f32 %v45
    %v49 = vcvt.s32.f32 %v46
    %v50 = vld [vmem:[#allocation2] sm:$0xff]
    %v51 = vld [vmem:[#allocation2 + $0x8] sm:$0xff]
    %vm52 = vcmask 130048
    %v54 = vsel %vm52, %v47, 0
    %v57 = vsel %vm52, %v48, 0
    %v60 = vsel %vm52, %v49, 0
    %62 = vmatpush.msra.mxu0 0.0
    %63 = vmatpush.msra.mxu0 0.0
    %64 = vmatpush.msra.mxu0 0.0
    %65 = vmatpush.msra.mxu0 0.0
    %66 = vmatpush.msra.mxu0 0.0
    %67 = vmatpush.msra.mxu0 0.0
    %68 = vmatpush.msra.mxu0 0.0
    %69 = vmatpush.msra.mxu0 0.0
    %70 = vmatpush.msra.mxu0 0.0
    %71 = vmatpush.msra.mxu0 0.0
    %72 = vmatpush.msra.mxu0 0.0
    %73 = vmatpush.msra.mxu0 0.0
    %74 = vmatpush.msra.mxu0 0.0
    %75 = vmatpush.msra.mxu0 0.0
    %76 = vmatpush.msra.mxu0 %v51
    %77 = vmatpush.msra.mxu0 %v50
    %78 = vmatmul.f32.gmra.mxu0 %v54
    %v79 = vpop.f32.mrf.mxu0
    %v80 = vadd.f32 0.0, %v79
    %81 = vmatmul.f32.gmra.mxu0 %v57
    %v82 = vpop.f32.mrf.mxu0
    %v83 = vadd.f32 0.0, %v82
    %84 = vmatmul.f32.gmra.mxu0 %v60
    %v85 = vpop.f32.mrf.mxu0
    %v86 = vadd.f32 0.0, %v85
    %87 = vdwg.mxu0
    %88 = vst [vmem:[%s2] sm:$0xff] %v80
    %89 = vst [vmem:[%s2 + $0x8] sm:$0xff] %v83
    %90 = vst [vmem:[%s2 + $0x10] sm:$0xff] %v86
    // Predicated region
    $region14: #{_din_input_embedding_forward.5} parent=1 // pred_check
      _
    $region15: #{_din_input_embedding_forward.5} parent=1 // pred_check_branch
      %92 = sbr.rel (0) target = $region17
    $region16: #{_din_input_embedding_forward.5} parent=1 // pred_region
      _
    $region17: #{_din_input_embedding_forward.5} parent=1 // pred_fallthru
      _
    // Predicated region
    $region18: #{_din_input_embedding_forward.5} parent=1 // pred_check
      _
    $region19: #{_din_input_embedding_forward.5} parent=1 // pred_check_branch
      %94 = sbr.rel (0) target = $region21
    $region20: #{_din_input_embedding_forward.5} parent=1 // pred_region
      _
    $region21: #{_din_input_embedding_forward.5} parent=1 // pred_fallthru
      _
    %95 = vsyncpa [#allocation3], 1

// kernel: _din_input_embedding_forward.4
$region0: #{_din_input_embedding_forward.4}
  #allocation0 [shape = 'u32[]', space=smem, size = 0x4, offset = 0x4, fixed_abs, tag = 'smem constant byte address 0x4 - core index']
  #allocation1 [shape = 'u32[72,128]{1,0:T(1,128)}', space=vmem, size = 0x9000, scoped, tag = 'internal scratch']
  %s0 = inlined_call_operand.vmem [shape: f32[64,128], index: 0, kind: input, shape index: {}]
  %s1 = inlined_call_operand.vmem [shape: s32[24,1], index: 1, kind: input, shape index: {}]
  %s2 = inlined_call_operand.vmem [shape: f32[24,128], index: 2, kind: output, shape index: {}]
  %s3 = sld [smem:[#allocation0]]
  $region18: #{_din_input_embedding_forward.4} parent=0
    _
  %s5 = ssub.s32 1, %s3
  %s6 = scalar_select 0, %s5, %s3
  // Predicated region
  $region2: #{_din_input_embedding_forward.4} parent=0 // pred_check
    _
  $region3: #{_din_input_embedding_forward.4} parent=0 // pred_check_branch
    %8 = sbr.rel (0) target = $region5
  $region4: #{_din_input_embedding_forward.4} parent=0 // pred_region
    _
  $region5: #{_din_input_embedding_forward.4} parent=0 // pred_fallthru
    _
  // Predicated region
  $region6: #{_din_input_embedding_forward.4} parent=0 // pred_check
    _
  $region7: #{_din_input_embedding_forward.4} parent=0 // pred_check_branch
    %10 = sbr.rel (0) target = $region9
  $region8: #{_din_input_embedding_forward.4} parent=0 // pred_region
    _
  $region9: #{_din_input_embedding_forward.4} parent=0 // pred_fallthru
    _
  %v11 = vld [vmem:[%s1] sm:$0xff]
  %v12 = vld [vmem:[%s1 + $0x8] sm:$0xff]
  %v13 = vld [vmem:[%s1 + $0x10] sm:$0xff]
  %v14 = vlaneseq
  %v15 = vand.u32 %v14, 127
  %16 = vset.pattern.permute.xlu0 0
  %17 = vperm.xlu0 %16, %v11
  %v18 = vpop.permute.xlu0 %17
  %19 = vset.pattern.permute.xlu0 0
  %20 = vperm.xlu0 %19, %v12
  %v21 = vpop.permute.xlu0 %20
  %22 = vset.pattern.permute.xlu0 0
  %23 = vperm.xlu0 %22, %v13
  %v24 = vpop.permute.xlu0 %23
  %vm25 = vcmp.eq.s32.totalorder %v18, %v15
  %vm26 = vcmp.eq.s32.totalorder %v21, %v15
  %vm27 = vcmp.eq.s32.totalorder %v24, %v15
  %v28 = vsel %vm25, 1, 0
  %v29 = vsel %vm26, 1, 0
  %v30 = vsel %vm27, 1, 0
  %v31 = vcvt.s32.f32 %v28
  %v32 = vcvt.s32.f32 %v29
  %v33 = vcvt.s32.f32 %v30
  %v34 = vld [vmem:[%s0] sm:$0xff]
  %v35 = vld [vmem:[%s0 + $0x8] sm:$0xff]
  %v36 = vld [vmem:[%s0 + $0x10] sm:$0xff]
  %v37 = vld [vmem:[%s0 + $0x18] sm:$0xff]
  %v38 = vld [vmem:[%s0 + $0x20] sm:$0xff]
  %v39 = vld [vmem:[%s0 + $0x28] sm:$0xff]
  %v40 = vld [vmem:[%s0 + $0x30] sm:$0xff]
  %v41 = vld [vmem:[%s0 + $0x38] sm:$0xff]
  %vm42 = vcmask 523264
  %v44 = vsel %vm42, %v31, 0
  %v47 = vsel %vm42, %v32, 0
  %v50 = vsel %vm42, %v33, 0
  %52 = vmatpush.msra.mxu0 0.0
  %53 = vmatpush.msra.mxu0 0.0
  %54 = vmatpush.msra.mxu0 0.0
  %55 = vmatpush.msra.mxu0 0.0
  %56 = vmatpush.msra.mxu0 0.0
  %57 = vmatpush.msra.mxu0 0.0
  %58 = vmatpush.msra.mxu0 0.0
  %59 = vmatpush.msra.mxu0 0.0
  %60 = vmatpush.msra.mxu0 %v41
  %61 = vmatpush.msra.mxu0 %v40
  %62 = vmatpush.msra.mxu0 %v39
  %63 = vmatpush.msra.mxu0 %v38
  %64 = vmatpush.msra.mxu0 %v37
  %65 = vmatpush.msra.mxu0 %v36
  %66 = vmatpush.msra.mxu0 %v35
  %67 = vmatpush.msra.mxu0 %v34
  %68 = vmatmul.f32.gmra.mxu0 %v44
  %v69 = vpop.f32.mrf.mxu0
  %v70 = vadd.f32 0.0, %v69
  %71 = vmatmul.f32.gmra.mxu0 %v47
  %v72 = vpop.f32.mrf.mxu0
  %v73 = vadd.f32 0.0, %v72
  %74 = vmatmul.f32.gmra.mxu0 %v50
  %v75 = vpop.f32.mrf.mxu0
  %v76 = vadd.f32 0.0, %v75
  %77 = vdwg.mxu0
  %78 = vst [vmem:[%s2] sm:$0xff] %v70
  %79 = vst [vmem:[%s2 + $0x8] sm:$0xff] %v73
  %80 = vst [vmem:[%s2 + $0x10] sm:$0xff] %v76
  // Predicated region
  $region10: #{_din_input_embedding_forward.4} parent=0 // pred_check
    _
  $region11: #{_din_input_embedding_forward.4} parent=0 // pred_check_branch
    %82 = sbr.rel (0) target = $region13
  $region12: #{_din_input_embedding_forward.4} parent=0 // pred_region
    _
  $region13: #{_din_input_embedding_forward.4} parent=0 // pred_fallthru
    _
  // Predicated region
  $region14: #{_din_input_embedding_forward.4} parent=0 // pred_check
    _
  $region15: #{_din_input_embedding_forward.4} parent=0 // pred_check_branch
    %84 = sbr.rel (0) target = $region17
  $region16: #{_din_input_embedding_forward.4} parent=0 // pred_region
    _
  $region17: #{_din_input_embedding_forward.4} parent=0 // pred_fallthru
    _

</llo_original>
